<compile_context>
chip_gen: v6e
topology: v6e:2x2x1
jax: 0.10.0
libtpu: 0.0.40
codegen_flags: <defaults>
</compile_context>

<pallas_src>
import math

import jax
import jax.numpy as jnp
from jax.experimental import pallas as pl
from jax.experimental.pallas import tpu as pltpu


def _pixel_preprocess_kernel(x_ref, o_ref):
    # Pure VPU elementwise hot path: in-kernel cast, constant-multiply normalize.
    x = x_ref[...].astype(jnp.float32)
    o_ref[...] = (x * jnp.float32(1.0 / 255.0) - jnp.float32(0.5)).astype(o_ref.dtype)


def _native_sublane(dtype) -> int:
    # Native sublane tile of the *input* dtype: (32,128) u8/i8, (16,128) 16-bit,
    # (8,128) 32-bit.
    itemsize = jnp.dtype(dtype).itemsize
    return {1: 32, 2: 16}.get(itemsize, 8)


def pixel_preprocess(
    x: jax.Array,
    *,
    out_dtype=None,
    target_block_bytes: int = 2 * 1024 * 1024,
    lane_block: int = 4096,          # width tile (multiple of 128)
    max_lane_width: int = 16384,     # cap for the lane-dense re-chunk
    core_parallel: bool = False,     # opt-in: shard row axis across v7x's 2 TCs
) -> jax.Array:
    """Normalizes pixel observations to [-0.5, 0.5]: x / 255.0 - 0.5.

    Returns a floating dtype: the input dtype if it is floating, else float32,
    unless `out_dtype` (e.g. jnp.bfloat16 for uint8 frames) is given explicitly.
    """
    shape = x.shape
    if out_dtype is None:
        out_dtype = x.dtype if jnp.issubdtype(x.dtype, jnp.floating) else jnp.float32
    out_dtype = jnp.dtype(out_dtype)
    assert jnp.issubdtype(out_dtype, jnp.floating), "output must be floating"

    n = x.size
    if n == 0:
        return x.astype(out_dtype)

    # ---- Lane-dense 2D view (metadata-only reshape of a contiguous array). ----
    if n % 128 == 0:
        # Largest multiple of 128 that divides n, capped at max_lane_width.
        width = 128
        w = min(max_lane_width, n)
        w = (w // 128) * 128
        while w >= 128:
            if n % w == 0:
                width = w
                break
            w -= 128
        rows = n // width
    else:
        # Fallback: cannot be lane-dense anyway; merge trailing dims as before.
        if x.ndim <= 1:
            rows, width = 1, max(n, 1)
        elif x.ndim == 2:
            rows, width = shape
        else:
            rows = math.prod(shape[:-2])
            width = shape[-2] * shape[-1]
    x2d = x.reshape(rows, width)

    in_itemsize = jnp.dtype(x.dtype).itemsize
    out_itemsize = out_dtype.itemsize
    sublane = _native_sublane(x.dtype)

    # ---- Width tiling: cap block bytes at tr*tw*out_itemsize, not tr*width. ----
    full_width_fits = width * out_itemsize * max(1, min(sublane, rows)) <= target_block_bytes
    if full_width_fits or width <= lane_block:
        tw = width                      # full-width fast path (always legal)
    else:
        tw = lane_block                 # multiple of 128; ragged last block masked
    grid_cols = pl.cdiv(width, tw)

    # ---- Row tiling: ~target_block_bytes of output per block, sublane-aligned. ----
    row_block_bytes = max(1, tw * out_itemsize)
    tr = max(1, target_block_bytes // row_block_bytes)
    if tr >= rows:
        tr = rows                       # block == full row extent (always legal)
    else:
        tr = max(sublane, (tr // sublane) * sublane)
        tr = min(tr, rows)
    grid_rows = pl.cdiv(rows, tr)       # ragged last block masked by Pallas

    cost = pl.CostEstimate(
        flops=2 * n,
        transcendentals=0,
        bytes_accessed=n * in_itemsize + n * out_itemsize,
    )

    # Double-buffered in + out blocks, plus headroom; stays within every chip's
    # scoped-VMEM default at the 2 MiB target (do NOT scale with total VMEM).
    block_vmem = tr * tw * (in_itemsize + out_itemsize)
    vmem_limit = min(64 * 1024 * 1024,
                     max(16 * 1024 * 1024, 2 * block_vmem + (2 << 20)))

    row_sem = pltpu.CORE_PARALLEL if core_parallel else pltpu.PARALLEL
    params = pltpu.CompilerParams(
        dimension_semantics=(row_sem, pltpu.PARALLEL),
        vmem_limit_bytes=vmem_limit,
    )

    out2d = pl.pallas_call(
        _pixel_preprocess_kernel,
        out_shape=jax.ShapeDtypeStruct((rows, width), out_dtype),
        grid=(grid_rows, grid_cols),
        in_specs=[pl.BlockSpec((tr, tw), lambda i, j: (i, j))],
        out_specs=pl.BlockSpec((tr, tw), lambda i, j: (i, j)),
        compiler_params=params,
        cost_estimate=cost,
    )(x2d)

    return out2d.reshape(shape)


if __name__ == "__main__":
    key = jax.random.PRNGKey(0)
    # Pixel observations: batch=2, stacked channels=4, 16x16 spatial (NCHW).
    x = jax.random.uniform(key, (2, 4, 16, 16), dtype=jnp.float32) * 255.0

    # Float input path.
    y = pixel_preprocess(x)
    jax.block_until_ready(y)
    y_ref = x / 255.0 - 0.5
    assert y.shape == x.shape and y.dtype == x.dtype
    assert jnp.allclose(y, y_ref, atol=1e-6), "float32 mismatch vs reference"

    # Integer (uint8) pixel path: in-kernel cast; output must stay floating.
    x_u8 = x.astype(jnp.uint8)
    y_u8 = pixel_preprocess(x_u8)
    jax.block_until_ready(y_u8)
    y_u8_ref = x_u8.astype(jnp.float32) / 255.0 - 0.5
    assert y_u8.shape == x_u8.shape and y_u8.dtype == jnp.float32
    assert jnp.allclose(y_u8, y_u8_ref, atol=1e-6), "uint8 mismatch vs reference"

    # Opt-in bf16 output for the write-dominated uint8 path.
    y_bf16 = pixel_preprocess(x_u8, out_dtype=jnp.bfloat16)
    jax.block_until_ready(y_bf16)
    assert y_bf16.dtype == jnp.bfloat16
    assert jnp.allclose(y_bf16.astype(jnp.float32), y_u8_ref, atol=2e-3), "bf16 mismatch"

    # Exercise the 2-D tiling path (width tiling + ragged masked blocks).
    x_big = (jax.random.uniform(jax.random.PRNGKey(1), (3, 4, 40, 40), dtype=jnp.float32)
             * 255.0)
    y_big = pixel_preprocess(x_big, target_block_bytes=4096)
    jax.block_until_ready(y_big)
    assert jnp.allclose(y_big, x_big / 255.0 - 0.5, atol=1e-6), "tiled-path mismatch"

    print("KERNEL_OK")
</pallas_src>

<mosaic_0001>
module attributes {stable_mosaic.version = 11 : i64} {
  func.func @_pixel_preprocess_kernel(%arg0: i32, %arg1: i32, %arg2: memref<1x2048xf32, #tpu.memory_space<vmem>>, %arg3: memref<1x2048xf32, #tpu.memory_space<vmem>>) attributes {dimension_semantics = [#tpu.dimension_semantics<parallel>, #tpu.dimension_semantics<parallel>], iteration_bounds = array<i64: 1, 1>, scalar_prefetch = 0 : i64, scratch_operands = 0 : i64, tpu.core_type = #tpu.core_type<tc>, window_params = [{transform_indices = @transform_0, window_bounds = array<i64: 1, 2048>}, {transform_indices = @transform_1, window_bounds = array<i64: 1, 2048>}]} {
    %c0 = arith.constant 0 : index
    %c0_0 = arith.constant 0 : index
    %0 = vector.load %arg2[%c0, %c0_0] : memref<1x2048xf32, #tpu.memory_space<vmem>>, vector<1x2048xf32>
    %cst = arith.constant 0.00392156886 : f32
    %1 = vector.broadcast %cst : f32 to vector<1x2048xf32>
    %2 = arith.mulf %0, %1 : vector<1x2048xf32>
    %cst_1 = arith.constant 5.000000e-01 : f32
    %3 = vector.broadcast %cst_1 : f32 to vector<1x2048xf32>
    %4 = arith.subf %2, %3 : vector<1x2048xf32>
    %c0_2 = arith.constant 0 : index
    %c0_3 = arith.constant 0 : index
    %5 = vector.load %arg3[%c0_2, %c0_3] : memref<1x2048xf32, #tpu.memory_space<vmem>>, vector<1x2048xf32>
    tpu.vector_store %arg3[%c0_2, %c0_3], %4 {strides = array<i32>} : memref<1x2048xf32, #tpu.memory_space<vmem>>, vector<1x2048xf32>,
    return
  }
  func.func @transform_0(%arg0: i32, %arg1: i32) -> (i32, i32) {
    %c0_i32 = arith.constant 0 : i32
    return %arg0, %arg1 : i32, i32
  }
  func.func @transform_1(%arg0: i32, %arg1: i32) -> (i32, i32) {
    %c0_i32 = arith.constant 0 : i32
    return %arg0, %arg1 : i32, i32
  }
}

</mosaic_0001>

<llo_original>
// kernel: tpu_custom_call.1
$region0: #{tpu_custom_call.1}
  #allocation0 [shape = 'u32[]', space=smem, size = 0x4, offset = 0x4, fixed_abs, tag = 'smem constant byte address 0x4 - core index']
  #allocation1 [shape = 'u32[144,128]{1,0:T(1,128)}', space=vmem, size = 0x12000, scoped, tag = 'internal scratch']
  %s0 = inlined_call_operand.hbm [shape: f32[1,2048], index: 0, kind: input, shape index: {}]
  %s1 = inlined_call_operand.hbm [shape: f32[1,2048], index: 1, kind: output, shape index: {}]
  %s2 = sld [smem:[#allocation0]]
  $region18: #{tpu_custom_call.1} parent=0
    _
  %s4 = ssub.s32 1, %s2
  %s5 = scalar_select 0, %s4, %s2
  $region1: #{tpu_custom_call.1} parent=0
    #allocation2 [shape = 'u8[8192]{0}', space=vmem, size = 0x2000, scoped, tag = 'input window, operand 0, single buffered']
    #allocation3 [shape = 's32[1]{0}', space=sflag, size = 0x4, scoped, tag = 'scoped memory for tpu_custom_call.1']
    #allocation4 [shape = 's32[1]{0}', space=sflag, size = 0x4, scoped, tag = 'scoped memory for tpu_custom_call.1']
    #allocation5 [shape = 'u8[8192]{0}', space=vmem, size = 0x2000, scoped, tag = 'output window, operand 0, single buffered']
    %6 = vsyncpa [#allocation3], 0
    %7 = vsyncpa [#allocation4], 0
    // Predicated region
    $region2: #{tpu_custom_call.1} parent=1 // pred_check
      _
    $region3: #{tpu_custom_call.1} parent=1 // pred_check_branch
      %9 = sbr.rel (0) target = $region5
    $region4: #{tpu_custom_call.1} parent=1 // pred_region
      %s11 = ssub.s32 256, 256
      %12 = vsyncadd [#allocation3], %s11
      %s14 = sshll.u32 [#allocation2], 4
      %s15 = int_to_ptr.vmem [resolvable:$true] %s14
      %17 = dma.hbm_to_vmem [thread:$0]  %s0, 256, %s15, [#allocation3]
    $region5: #{tpu_custom_call.1} parent=1 // pred_fallthru
      _
    // Predicated region
    $region6: #{tpu_custom_call.1} parent=1 // pred_check
      _
    $region7: #{tpu_custom_call.1} parent=1 // pred_check_branch
      %19 = sbr.rel (0) target = $region9
    $region8: #{tpu_custom_call.1} parent=1 // pred_region
      %20 = dma.done [#allocation3], 256
    $region9: #{tpu_custom_call.1} parent=1 // pred_fallthru
      _
    %v21 = vld [vmem:[#allocation2] sm:$0xff]
    %v22 = vld [vmem:[#allocation2 + $0x8] sm:$0xff]
    %v23 = vmul.f32 %v21, 0.003921569
    %v24 = vmul.f32 %v22, 0.003921569
    %v25 = vsub.f32 %v23, 0.5
    %v26 = vsub.f32 %v24, 0.5
    %27 = vst [vmem:[#allocation5] sm:$0xff] %v25
    %28 = vst [vmem:[#allocation5 + $0x8] sm:$0xff] %v26
    // Predicated region
    $region10: #{tpu_custom_call.1} parent=1 // pred_check
      _
    $region11: #{tpu_custom_call.1} parent=1 // pred_check_branch
      %30 = sbr.rel (0) target = $region13
    $region12: #{tpu_custom_call.1} parent=1 // pred_region
      %s32 = ssub.s32 256, 256
      %33 = vsyncadd [#allocation4], %s32
      %s35 = sshll.u32 [#allocation5], 4
      %s36 = int_to_ptr.vmem [resolvable:$true] %s35
      %38 = dma.vmem_to_hbm [thread:$0]  %s36, 256, %s1, [#allocation4]
    $region13: #{tpu_custom_call.1} parent=1 // pred_fallthru
      _
    // Predicated region
    $region14: #{tpu_custom_call.1} parent=1 // pred_check
      _
    $region15: #{tpu_custom_call.1} parent=1 // pred_check_branch
      %40 = sbr.rel (0) target = $region17
    $region16: #{tpu_custom_call.1} parent=1 // pred_region
      %41 = dma.done [#allocation4], 256
    $region17: #{tpu_custom_call.1} parent=1 // pred_fallthru
      _
    %42 = vsyncpa [#allocation3], 1
    %43 = vsyncpa [#allocation4], 1

</llo_original>
